<compile_context>
chip_gen: v7x
topology: tpu7x:2x2x1
jax: 0.10.0
libtpu: 0.0.40
codegen_flags: <defaults>
</compile_context>

<pallas_src>
import functools

import jax
import jax.numpy as jnp
import numpy as np
from jax.experimental import pallas as pl
from jax.experimental.pallas import tpu as pltpu


def _lstm_kernel(x_ref, w_ref, sb_ref, l_ref, *,
                 seq, batch, batch_pad, hidden, z_rows):
    """Single-invocation LSTM forward.

    x_ref : (seq*batch_pad, z_rows) bf16, time-major slabs, feature zero-padded.
    w_ref : (z_rows + 4H, 4H) bf16 = [W_ih^T (row-padded) ; W_hh^T zero-padded to 4H
            rows], g-gate columns pre-scaled by 2.
    sb_ref: (2*batch_pad + 8, 4H) f32 = [h0 ; c0 ; bias row (+ zero pad rows)],
            h0/c0 occupy lanes [0,H); bias g-block pre-scaled by 2.
    l_ref : (1, H) f32 output = mean over the real batch rows of h_T.
    """
    H = hidden
    G = 4 * H
    Bp = batch_pad

    w_ih = w_ref[0:z_rows, :]             # (z_rows, G) bf16, bf16-tile-aligned slice
    w_hh = w_ref[z_rows:z_rows + G, :]    # (G, G) bf16, rows >= H are zero

    sb = sb_ref[...]                      # (2*Bp + 8, G) f32
    h = sb[0:Bp, :]                       # (Bp, G); lanes >= H zero / don't-care
    c = sb[Bp:2 * Bp, :]
    bias = sb[2 * Bp:2 * Bp + 1, :]       # (1, G), g-block already doubled

    # Hoisted input projection for ALL timesteps (one MXU pass, off the serial chain).
    gx = jnp.dot(x_ref[...], w_ih, preferred_element_type=jnp.float32) + bias

    # seq is small and static -> fully unrolled; the serial chain per step is one
    # (Bp,G)@(G,G) bf16 matmul, one full-vreg sigmoid, three XLU rolls, one tanh.
    for t in range(seq):
        gates = gx[t * Bp:(t + 1) * Bp, :] + jnp.dot(
            h.astype(jnp.bfloat16), w_hh, preferred_element_type=jnp.float32)
        # One full-vreg sigmoid covers i, f, o and (via the pre-scaled columns) g:
        #   tanh(g) = 2*sigmoid(2g) - 1.
        act = jax.nn.sigmoid(gates)                       # (Bp, G) f32
        f_al = pltpu.roll(act, shift=3 * H, axis=1)       # f -> lanes [0, H)
        g_al = pltpu.roll(act, shift=2 * H, axis=1)       # g -> lanes [0, H)
        o_al = pltpu.roll(act, shift=1 * H, axis=1)       # o -> lanes [0, H)
        # Lanes [0,H) hold the true state; lanes [H,G) hold bounded garbage that the
        # zero rows of the padded W_hh wipe out of the next step's matmul.
        c = f_al * c + act * (2.0 * g_al - 1.0)           # i*tanh(g) + f*c
        h = o_al * jnp.tanh(c)

    # torch.mean(h_n, dim=1): average only the real (unpadded) batch rows, as a
    # full-width masked sum (no sublane slice feeding the reduce).
    rows = jax.lax.broadcasted_iota(jnp.int32, (Bp, G), 0)
    wmean = jnp.where(rows < batch, 1.0 / batch, 0.0).astype(jnp.float32)
    l_full = jnp.sum(h * wmean, axis=0, keepdims=True)    # (1, G)
    l_ref[...] = l_full[:, 0:H]


def path_lstm_forward(trajects, w_ih, w_hh, b_ih, b_hh, h0, c0):
    """trajects: (batch, seq, z_len) batch_first, like the PyTorch module.

    Assumes num_layers * num_directions == 1 (module defaults).  In a real model the
    weight/state packing below is done once and cached; it is recomputed per call here
    only to keep the script self-contained.
    """
    batch, seq, z_len = trajects.shape
    H = w_hh.shape[1]
    G = 4 * H
    Bp = ((batch + 7) // 8) * 8           # pad batch rows to a full f32 sublane group
    z_rows = ((z_len + 15) // 16) * 16    # pad input-proj K to a full bf16 sublane tile

    # Pre-scale the g-gate columns by 2 so the kernel can use one fused sigmoid.
    gate_scale = jnp.concatenate(
        [jnp.ones((2 * H,), jnp.float32),
         jnp.full((H,), 2.0, jnp.float32),
         jnp.ones((H,), jnp.float32)])[None, :]                       # (1, G)

    # x: time-major, batch-padded, feature-padded; timestep t owns the contiguous
    # sublane-aligned row slab [t*Bp, (t+1)*Bp).  bf16 MXU operand.
    x = jnp.transpose(trajects, (1, 0, 2)).astype(jnp.float32)        # (seq, B, z)
    x = jnp.pad(x, ((0, 0), (0, Bp - batch), (0, z_rows - z_len)))    # (seq, Bp, z_rows)
    x2d = x.reshape(seq * Bp, z_rows).astype(jnp.bfloat16)

    # bf16 weight slab: [W_ih^T ; W_hh^T], both gate-scaled; W_hh^T zero-padded to
    # (G, G) rows so the recurrent matmul consumes the full (Bp, G) state vreg.
    w_ih_t = jnp.transpose(w_ih).astype(jnp.float32) * gate_scale     # (z, G)
    w_ih_t = jnp.pad(w_ih_t, ((0, z_rows - z_len), (0, 0)))           # (z_rows, G)
    w_hh_t = jnp.transpose(w_hh).astype(jnp.float32) * gate_scale     # (H, G)
    w_hh_t = jnp.pad(w_hh_t, ((0, G - H), (0, 0)))                    # (G, G)
    w_bf = jnp.concatenate([w_ih_t, w_hh_t], axis=0).astype(jnp.bfloat16)

    # f32 state/bias slab: h0 | c0 (lanes [0,H), batch rows padded) | folded bias.
    def _state(s):
        s2 = s.reshape(batch, H).astype(jnp.float32)
        return jnp.pad(s2, ((0, Bp - batch), (0, G - H)))             # (Bp, G)
    bias = ((b_ih + b_hh).astype(jnp.float32)[None, :] * gate_scale)  # (1, G)
    bias = jnp.pad(bias, ((0, 7), (0, 0)))                            # (8, G)
    sb = jnp.concatenate([_state(h0), _state(c0), bias], axis=0)      # (2*Bp+8, G)

    kernel = functools.partial(_lstm_kernel, seq=seq, batch=batch,
                               batch_pad=Bp, hidden=H, z_rows=z_rows)

    # Single invocation, no grid: auto-pipelining buys nothing at one grid point and
    # would double-buffer every operand; whole-array VMEM refs drop that scaffolding.
    return pl.pallas_call(
        kernel,
        out_shape=jax.ShapeDtypeStruct((1, H), jnp.float32),
        in_specs=[
            pl.BlockSpec(memory_space=pltpu.MemorySpace.VMEM),   # x slab (bf16)
            pl.BlockSpec(memory_space=pltpu.MemorySpace.VMEM),   # weight slab (bf16)
            pl.BlockSpec(memory_space=pltpu.MemorySpace.VMEM),   # h0/c0/bias slab (f32)
        ],
        out_specs=pl.BlockSpec(memory_space=pltpu.MemorySpace.VMEM),
    )(x2d, w_bf, sb)


def path_lstm_reference(trajects, w_ih, w_hh, b_ih, b_hh, h0, c0):
    """Pure-JAX f32 reference (same math as torch nn.LSTM, gate order i,f,g,o)."""
    batch, seq, z_len = trajects.shape
    l_len = w_hh.shape[1]
    x = jnp.transpose(trajects, (1, 0, 2)).astype(jnp.float32)
    w_ih_t = jnp.transpose(w_ih)
    w_hh_t = jnp.transpose(w_hh)
    b = (b_ih + b_hh)[None, :]

    def step(carry, x_t):
        h, c = carry
        gates = x_t @ w_ih_t + h @ w_hh_t + b
        i = jax.nn.sigmoid(gates[:, 0 * l_len:1 * l_len])
        f = jax.nn.sigmoid(gates[:, 1 * l_len:2 * l_len])
        g = jnp.tanh(gates[:, 2 * l_len:3 * l_len])
        o = jax.nn.sigmoid(gates[:, 3 * l_len:4 * l_len])
        c = f * c + i * g
        h = o * jnp.tanh(c)
        return (h, c), None

    (h_n, _), _ = jax.lax.scan(step, (h0.reshape(batch, l_len),
                                      c0.reshape(batch, l_len)), x)
    return jnp.mean(h_n, axis=0, keepdims=True)


if __name__ == "__main__":
    # Small shapes consistent with the module: batch=2, seq=8, z_len=4, l_len=32
    batch, seq, z_len, l_len = 2, 8, 4, 32
    num_layers, num_directions = 1, 1

    key = jax.random.PRNGKey(0)
    k_x, k_wih, k_whh, k_bih, k_bhh, k_h0, k_c0 = jax.random.split(key, 7)

    # Deterministic parameter init (mimics torch's U(-1/sqrt(H), 1/sqrt(H)))
    bound = 1.0 / np.sqrt(l_len)
    w_ih = jax.random.uniform(k_wih, (4 * l_len, z_len), jnp.float32, -bound, bound)
    w_hh = jax.random.uniform(k_whh, (4 * l_len, l_len), jnp.float32, -bound, bound)
    b_ih = jax.random.uniform(k_bih, (4 * l_len,), jnp.float32, -bound, bound)
    b_hh = jax.random.uniform(k_bhh, (4 * l_len,), jnp.float32, -bound, bound)

    trajects = jax.random.normal(k_x, (batch, seq, z_len), jnp.float32)
    # Deterministic stand-in for the module's per-forward torch.randn initial states
    h0 = jax.random.normal(k_h0, (num_layers * num_directions, batch, l_len), jnp.float32)
    c0 = jax.random.normal(k_c0, (num_layers * num_directions, batch, l_len), jnp.float32)

    out = path_lstm_forward(trajects, w_ih, w_hh, b_ih, b_hh, h0, c0)
    out = jax.block_until_ready(out)

    ref = path_lstm_reference(trajects, w_ih, w_hh, b_ih, b_hh, h0, c0)
    # Tolerance loosened vs the pure-f32 version: MXU operands are bf16 (f32 accumulate).
    np.testing.assert_allclose(np.asarray(out), np.asarray(ref),
                               rtol=2e-2, atol=2e-2)

    assert out.shape == (num_layers * num_directions, l_len)
    print("KERNEL_OK")
</pallas_src>

<mosaic_0001>
module attributes {stable_mosaic.version = 11 : i64} {
  func.func @_lstm_kernel(%arg0: memref<64x16xbf16, #tpu.memory_space<vmem>>, %arg1: memref<144x128xbf16, #tpu.memory_space<vmem>>, %arg2: memref<24x128xf32, #tpu.memory_space<vmem>>, %arg3: memref<1x32xf32, #tpu.memory_space<vmem>>) attributes {dimension_semantics = [], scalar_prefetch = 0 : i64, scratch_operands = 0 : i64, tpu.core_type = #tpu.core_type<tc>} {
    %c0 = arith.constant 0 : index
    %c0_0 = arith.constant 0 : index
    %0 = vector.load %arg1[%c0, %c0_0] : memref<144x128xbf16, #tpu.memory_space<vmem>>, vector<16x128xbf16>
    %c16 = arith.constant 16 : index
    %c0_1 = arith.constant 0 : index
    %1 = vector.load %arg1[%c16, %c0_1] : memref<144x128xbf16, #tpu.memory_space<vmem>>, vector<128x128xbf16>
    %c0_2 = arith.constant 0 : index
    %c0_3 = arith.constant 0 : index
    %2 = vector.load %arg2[%c0_2, %c0_3] : memref<24x128xf32, #tpu.memory_space<vmem>>, vector<24x128xf32>
    %3 = vector.extract_strided_slice %2 {offsets = [0, 0], sizes = [8, 128], strides = [1, 1]} : vector<24x128xf32> to vector<8x128xf32>
    %4 = vector.extract_strided_slice %2 {offsets = [8, 0], sizes = [8, 128], strides = [1, 1]} : vector<24x128xf32> to vector<8x128xf32>
    %5 = vector.extract_strided_slice %2 {offsets = [16, 0], sizes = [1, 128], strides = [1, 1]} : vector<24x128xf32> to vector<1x128xf32>
    %c0_4 = arith.constant 0 : index
    %c0_5 = arith.constant 0 : index
    %6 = vector.load %arg0[%c0_4, %c0_5] : memref<64x16xbf16, #tpu.memory_space<vmem>>, vector<64x16xbf16>
    %cst = arith.constant dense<0.000000e+00> : vector<64x128xf32>
    %7 = tpu.matmul %6, %0, %cst {dimension_numbers = #tpu.dot_dimension_numbers<[1], [0], [0], [1], [0, 0, 1, 1], [], []>} : vector<64x16xbf16>, vector<16x128xbf16>, vector<64x128xf32> -> vector<64x128xf32>
    %8 = vector.broadcast %5 : vector<1x128xf32> to vector<64x128xf32>
    %9 = arith.addf %7, %8 : vector<64x128xf32>
    %10 = vector.extract_strided_slice %9 {offsets = [0, 0], sizes = [8, 128], strides = [1, 1]} : vector<64x128xf32> to vector<8x128xf32>
    %11 = arith.truncf %3 : vector<8x128xf32> to vector<8x128xbf16>
    %cst_6 = arith.constant dense<0.000000e+00> : vector<8x128xf32>
    %12 = tpu.matmul %11, %1, %cst_6 {dimension_numbers = #tpu.dot_dimension_numbers<[1], [0], [0], [1], [0, 0, 1, 1], [], []>} : vector<8x128xbf16>, vector<128x128xbf16>, vector<8x128xf32> -> vector<8x128xf32>
    %13 = arith.addf %10, %12 : vector<8x128xf32>
    %14 = arith.negf %13 : vector<8x128xf32>
    %15 = math.exp %14 : vector<8x128xf32>
    %cst_7 = arith.constant 1.000000e+00 : f32
    %16 = vector.broadcast %cst_7 : f32 to vector<8x128xf32>
    %17 = arith.addf %16, %15 : vector<8x128xf32>
    %18 = arith.divf %16, %17 : vector<8x128xf32>
    %c96_i32 = arith.constant 96 : i32
    %19 = tpu.dynamic_rotate %18 by %c96_i32 dim 1 : vector<8x128xf32>, i32 -> vector<8x128xf32>
    %c64_i32 = arith.constant 64 : i32
    %20 = tpu.dynamic_rotate %18 by %c64_i32 dim 1 : vector<8x128xf32>, i32 -> vector<8x128xf32>
    %c32_i32 = arith.constant 32 : i32
    %21 = tpu.dynamic_rotate %18 by %c32_i32 dim 1 : vector<8x128xf32>, i32 -> vector<8x128xf32>
    %22 = arith.mulf %19, %4 : vector<8x128xf32>
    %cst_8 = arith.constant 2.000000e+00 : f32
    %23 = vector.broadcast %cst_8 : f32 to vector<8x128xf32>
    %24 = arith.mulf %23, %20 : vector<8x128xf32>
    %cst_9 = arith.constant 1.000000e+00 : f32
    %25 = vector.broadcast %cst_9 : f32 to vector<8x128xf32>
    %26 = arith.subf %24, %25 : vector<8x128xf32>
    %27 = arith.mulf %18, %26 : vector<8x128xf32>
    %28 = arith.addf %22, %27 : vector<8x128xf32>
    %29 = math.tanh %28 : vector<8x128xf32>
    %30 = arith.mulf %21, %29 : vector<8x128xf32>
    %31 = vector.extract_strided_slice %9 {offsets = [8, 0], sizes = [8, 128], strides = [1, 1]} : vector<64x128xf32> to vector<8x128xf32>
    %32 = arith.truncf %30 : vector<8x128xf32> to vector<8x128xbf16>
    %cst_10 = arith.constant dense<0.000000e+00> : vector<8x128xf32>
    %33 = tpu.matmul %32, %1, %cst_10 {dimension_numbers = #tpu.dot_dimension_numbers<[1], [0], [0], [1], [0, 0, 1, 1], [], []>} : vector<8x128xbf16>, vector<128x128xbf16>, vector<8x128xf32> -> vector<8x128xf32>
    %34 = arith.addf %31, %33 : vector<8x128xf32>
    %35 = arith.negf %34 : vector<8x128xf32>
    %36 = math.exp %35 : vector<8x128xf32>
    %cst_11 = arith.constant 1.000000e+00 : f32
    %37 = vector.broadcast %cst_11 : f32 to vector<8x128xf32>
    %38 = arith.addf %37, %36 : vector<8x128xf32>
    %39 = arith.divf %37, %38 : vector<8x128xf32>
    %c96_i32_12 = arith.constant 96 : i32
    %40 = tpu.dynamic_rotate %39 by %c96_i32_12 dim 1 : vector<8x128xf32>, i32 -> vector<8x128xf32>
    %c64_i32_13 = arith.constant 64 : i32
    %41 = tpu.dynamic_rotate %39 by %c64_i32_13 dim 1 : vector<8x128xf32>, i32 -> vector<8x128xf32>
    %c32_i32_14 = arith.constant 32 : i32
    %42 = tpu.dynamic_rotate %39 by %c32_i32_14 dim 1 : vector<8x128xf32>, i32 -> vector<8x128xf32>
    %43 = arith.mulf %40, %28 : vector<8x128xf32>
    %cst_15 = arith.constant 2.000000e+00 : f32
    %44 = vector.broadcast %cst_15 : f32 to vector<8x128xf32>
    %45 = arith.mulf %44, %41 : vector<8x128xf32>
    %cst_16 = arith.constant 1.000000e+00 : f32
    %46 = vector.broadcast %cst_16 : f32 to vector<8x128xf32>
    %47 = arith.subf %45, %46 : vector<8x128xf32>
    %48 = arith.mulf %39, %47 : vector<8x128xf32>
    %49 = arith.addf %43, %48 : vector<8x128xf32>
    %50 = math.tanh %49 : vector<8x128xf32>
    %51 = arith.mulf %42, %50 : vector<8x128xf32>
    %52 = vector.extract_strided_slice %9 {offsets = [16, 0], sizes = [8, 128], strides = [1, 1]} : vector<64x128xf32> to vector<8x128xf32>
    %53 = arith.truncf %51 : vector<8x128xf32> to vector<8x128xbf16>
    %cst_17 = arith.constant dense<0.000000e+00> : vector<8x128xf32>
    %54 = tpu.matmul %53, %1, %cst_17 {dimension_numbers = #tpu.dot_dimension_numbers<[1], [0], [0], [1], [0, 0, 1, 1], [], []>} : vector<8x128xbf16>, vector<128x128xbf16>, vector<8x128xf32> -> vector<8x128xf32>
    %55 = arith.addf %52, %54 : vector<8x128xf32>
    %56 = arith.negf %55 : vector<8x128xf32>
    %57 = math.exp %56 : vector<8x128xf32>
    %cst_18 = arith.constant 1.000000e+00 : f32
    %58 = vector.broadcast %cst_18 : f32 to vector<8x128xf32>
    %59 = arith.addf %58, %57 : vector<8x128xf32>
    %60 = arith.divf %58, %59 : vector<8x128xf32>
    %c96_i32_19 = arith.constant 96 : i32
    %61 = tpu.dynamic_rotate %60 by %c96_i32_19 dim 1 : vector<8x128xf32>, i32 -> vector<8x128xf32>
    %c64_i32_20 = arith.constant 64 : i32
    %62 = tpu.dynamic_rotate %60 by %c64_i32_20 dim 1 : vector<8x128xf32>, i32 -> vector<8x128xf32>
    %c32_i32_21 = arith.constant 32 : i32
    %63 = tpu.dynamic_rotate %60 by %c32_i32_21 dim 1 : vector<8x128xf32>, i32 -> vector<8x128xf32>
    %64 = arith.mulf %61, %49 : vector<8x128xf32>
    %cst_22 = arith.constant 2.000000e+00 : f32
    %65 = vector.broadcast %cst_22 : f32 to vector<8x128xf32>
    %66 = arith.mulf %65, %62 : vector<8x128xf32>
    %cst_23 = arith.constant 1.000000e+00 : f32
    %67 = vector.broadcast %cst_23 : f32 to vector<8x128xf32>
    %68 = arith.subf %66, %67 : vector<8x128xf32>
    %69 = arith.mulf %60, %68 : vector<8x128xf32>
    %70 = arith.addf %64, %69 : vector<8x128xf32>
    %71 = math.tanh %70 : vector<8x128xf32>
    %72 = arith.mulf %63, %71 : vector<8x128xf32>
    %73 = vector.extract_strided_slice %9 {offsets = [24, 0], sizes = [8, 128], strides = [1, 1]} : vector<64x128xf32> to vector<8x128xf32>
    %74 = arith.truncf %72 : vector<8x128xf32> to vector<8x128xbf16>
    %cst_24 = arith.constant dense<0.000000e+00> : vector<8x128xf32>
    %75 = tpu.matmul %74, %1, %cst_24 {dimension_numbers = #tpu.dot_dimension_numbers<[1], [0], [0], [1], [0, 0, 1, 1], [], []>} : vector<8x128xbf16>, vector<128x128xbf16>, vector<8x128xf32> -> vector<8x128xf32>
    %76 = arith.addf %73, %75 : vector<8x128xf32>
    %77 = arith.negf %76 : vector<8x128xf32>
    %78 = math.exp %77 : vector<8x128xf32>
    %cst_25 = arith.constant 1.000000e+00 : f32
    %79 = vector.broadcast %cst_25 : f32 to vector<8x128xf32>
    %80 = arith.addf %79, %78 : vector<8x128xf32>
    %81 = arith.divf %79, %80 : vector<8x128xf32>
    %c96_i32_26 = arith.constant 96 : i32
    %82 = tpu.dynamic_rotate %81 by %c96_i32_26 dim 1 : vector<8x128xf32>, i32 -> vector<8x128xf32>
    %c64_i32_27 = arith.constant 64 : i32
    %83 = tpu.dynamic_rotate %81 by %c64_i32_27 dim 1 : vector<8x128xf32>, i32 -> vector<8x128xf32>
    %c32_i32_28 = arith.constant 32 : i32
    %84 = tpu.dynamic_rotate %81 by %c32_i32_28 dim 1 : vector<8x128xf32>, i32 -> vector<8x128xf32>
    %85 = arith.mulf %82, %70 : vector<8x128xf32>
    %cst_29 = arith.constant 2.000000e+00 : f32
    %86 = vector.broadcast %cst_29 : f32 to vector<8x128xf32>
    %87 = arith.mulf %86, %83 : vector<8x128xf32>
    %cst_30 = arith.constant 1.000000e+00 : f32
    %88 = vector.broadcast %cst_30 : f32 to vector<8x128xf32>
    %89 = arith.subf %87, %88 : vector<8x128xf32>
    %90 = arith.mulf %81, %89 : vector<8x128xf32>
    %91 = arith.addf %85, %90 : vector<8x128xf32>
    %92 = math.tanh %91 : vector<8x128xf32>
    %93 = arith.mulf %84, %92 : vector<8x128xf32>
    %94 = vector.extract_strided_slice %9 {offsets = [32, 0], sizes = [8, 128], strides = [1, 1]} : vector<64x128xf32> to vector<8x128xf32>
    %95 = arith.truncf %93 : vector<8x128xf32> to vector<8x128xbf16>
    %cst_31 = arith.constant dense<0.000000e+00> : vector<8x128xf32>
    %96 = tpu.matmul %95, %1, %cst_31 {dimension_numbers = #tpu.dot_dimension_numbers<[1], [0], [0], [1], [0, 0, 1, 1], [], []>} : vector<8x128xbf16>, vector<128x128xbf16>, vector<8x128xf32> -> vector<8x128xf32>
    %97 = arith.addf %94, %96 : vector<8x128xf32>
    %98 = arith.negf %97 : vector<8x128xf32>
    %99 = math.exp %98 : vector<8x128xf32>
    %cst_32 = arith.constant 1.000000e+00 : f32
    %100 = vector.broadcast %cst_32 : f32 to vector<8x128xf32>
    %101 = arith.addf %100, %99 : vector<8x128xf32>
    %102 = arith.divf %100, %101 : vector<8x128xf32>
    %c96_i32_33 = arith.constant 96 : i32
    %103 = tpu.dynamic_rotate %102 by %c96_i32_33 dim 1 : vector<8x128xf32>, i32 -> vector<8x128xf32>
    %c64_i32_34 = arith.constant 64 : i32
    %104 = tpu.dynamic_rotate %102 by %c64_i32_34 dim 1 : vector<8x128xf32>, i32 -> vector<8x128xf32>
    %c32_i32_35 = arith.constant 32 : i32
    %105 = tpu.dynamic_rotate %102 by %c32_i32_35 dim 1 : vector<8x128xf32>, i32 -> vector<8x128xf32>
    %106 = arith.mulf %103, %91 : vector<8x128xf32>
    %cst_36 = arith.constant 2.000000e+00 : f32
    %107 = vector.broadcast %cst_36 : f32 to vector<8x128xf32>
    %108 = arith.mulf %107, %104 : vector<8x128xf32>
    %cst_37 = arith.constant 1.000000e+00 : f32
    %109 = vector.broadcast %cst_37 : f32 to vector<8x128xf32>
    %110 = arith.subf %108, %109 : vector<8x128xf32>
    %111 = arith.mulf %102, %110 : vector<8x128xf32>
    %112 = arith.addf %106, %111 : vector<8x128xf32>
    %113 = math.tanh %112 : vector<8x128xf32>
    %114 = arith.mulf %105, %113 : vector<8x128xf32>
    %115 = vector.extract_strided_slice %9 {offsets = [40, 0], sizes = [8, 128], strides = [1, 1]} : vector<64x128xf32> to vector<8x128xf32>
    %116 = arith.truncf %114 : vector<8x128xf32> to vector<8x128xbf16>
    %cst_38 = arith.constant dense<0.000000e+00> : vector<8x128xf32>
    %117 = tpu.matmul %116, %1, %cst_38 {dimension_numbers = #tpu.dot_dimension_numbers<[1], [0], [0], [1], [0, 0, 1, 1], [], []>} : vector<8x128xbf16>, vector<128x128xbf16>, vector<8x128xf32> -> vector<8x128xf32>
    %118 = arith.addf %115, %117 : vector<8x128xf32>
    %119 = arith.negf %118 : vector<8x128xf32>
    %120 = math.exp %119 : vector<8x128xf32>
    %cst_39 = arith.constant 1.000000e+00 : f32
    %121 = vector.broadcast %cst_39 : f32 to vector<8x128xf32>
    %122 = arith.addf %121, %120 : vector<8x128xf32>
    %123 = arith.divf %121, %122 : vector<8x128xf32>
    %c96_i32_40 = arith.constant 96 : i32
    %124 = tpu.dynamic_rotate %123 by %c96_i32_40 dim 1 : vector<8x128xf32>, i32 -> vector<8x128xf32>
    %c64_i32_41 = arith.constant 64 : i32
    %125 = tpu.dynamic_rotate %123 by %c64_i32_41 dim 1 : vector<8x128xf32>, i32 -> vector<8x128xf32>
    %c32_i32_42 = arith.constant 32 : i32
    %126 = tpu.dynamic_rotate %123 by %c32_i32_42 dim 1 : vector<8x128xf32>, i32 -> vector<8x128xf32>
    %127 = arith.mulf %124, %112 : vector<8x128xf32>
    %cst_43 = arith.constant 2.000000e+00 : f32
    %128 = vector.broadcast %cst_43 : f32 to vector<8x128xf32>
    %129 = arith.mulf %128, %125 : vector<8x128xf32>
    %cst_44 = arith.constant 1.000000e+00 : f32
    %130 = vector.broadcast %cst_44 : f32 to vector<8x128xf32>
    %131 = arith.subf %129, %130 : vector<8x128xf32>
    %132 = arith.mulf %123, %131 : vector<8x128xf32>
    %133 = arith.addf %127, %132 : vector<8x128xf32>
    %134 = math.tanh %133 : vector<8x128xf32>
    %135 = arith.mulf %126, %134 : vector<8x128xf32>
    %136 = vector.extract_strided_slice %9 {offsets = [48, 0], sizes = [8, 128], strides = [1, 1]} : vector<64x128xf32> to vector<8x128xf32>
    %137 = arith.truncf %135 : vector<8x128xf32> to vector<8x128xbf16>
    %cst_45 = arith.constant dense<0.000000e+00> : vector<8x128xf32>
    %138 = tpu.matmul %137, %1, %cst_45 {dimension_numbers = #tpu.dot_dimension_numbers<[1], [0], [0], [1], [0, 0, 1, 1], [], []>} : vector<8x128xbf16>, vector<128x128xbf16>, vector<8x128xf32> -> vector<8x128xf32>
    %139 = arith.addf %136, %138 : vector<8x128xf32>
    %140 = arith.negf %139 : vector<8x128xf32>
    %141 = math.exp %140 : vector<8x128xf32>
    %cst_46 = arith.constant 1.000000e+00 : f32
    %142 = vector.broadcast %cst_46 : f32 to vector<8x128xf32>
    %143 = arith.addf %142, %141 : vector<8x128xf32>
    %144 = arith.divf %142, %143 : vector<8x128xf32>
    %c96_i32_47 = arith.constant 96 : i32
    %145 = tpu.dynamic_rotate %144 by %c96_i32_47 dim 1 : vector<8x128xf32>, i32 -> vector<8x128xf32>
    %c64_i32_48 = arith.constant 64 : i32
    %146 = tpu.dynamic_rotate %144 by %c64_i32_48 dim 1 : vector<8x128xf32>, i32 -> vector<8x128xf32>
    %c32_i32_49 = arith.constant 32 : i32
    %147 = tpu.dynamic_rotate %144 by %c32_i32_49 dim 1 : vector<8x128xf32>, i32 -> vector<8x128xf32>
    %148 = arith.mulf %145, %133 : vector<8x128xf32>
    %cst_50 = arith.constant 2.000000e+00 : f32
    %149 = vector.broadcast %cst_50 : f32 to vector<8x128xf32>
    %150 = arith.mulf %149, %146 : vector<8x128xf32>
    %cst_51 = arith.constant 1.000000e+00 : f32
    %151 = vector.broadcast %cst_51 : f32 to vector<8x128xf32>
    %152 = arith.subf %150, %151 : vector<8x128xf32>
    %153 = arith.mulf %144, %152 : vector<8x128xf32>
    %154 = arith.addf %148, %153 : vector<8x128xf32>
    %155 = math.tanh %154 : vector<8x128xf32>
    %156 = arith.mulf %147, %155 : vector<8x128xf32>
    %157 = vector.extract_strided_slice %9 {offsets = [56, 0], sizes = [8, 128], strides = [1, 1]} : vector<64x128xf32> to vector<8x128xf32>
    %158 = arith.truncf %156 : vector<8x128xf32> to vector<8x128xbf16>
    %cst_52 = arith.constant dense<0.000000e+00> : vector<8x128xf32>
    %159 = tpu.matmul %158, %1, %cst_52 {dimension_numbers = #tpu.dot_dimension_numbers<[1], [0], [0], [1], [0, 0, 1, 1], [], []>} : vector<8x128xbf16>, vector<128x128xbf16>, vector<8x128xf32> -> vector<8x128xf32>
    %160 = arith.addf %157, %159 : vector<8x128xf32>
    %161 = arith.negf %160 : vector<8x128xf32>
    %162 = math.exp %161 : vector<8x128xf32>
    %cst_53 = arith.constant 1.000000e+00 : f32
    %163 = vector.broadcast %cst_53 : f32 to vector<8x128xf32>
    %164 = arith.addf %163, %162 : vector<8x128xf32>
    %165 = arith.divf %163, %164 : vector<8x128xf32>
    %c96_i32_54 = arith.constant 96 : i32
    %166 = tpu.dynamic_rotate %165 by %c96_i32_54 dim 1 : vector<8x128xf32>, i32 -> vector<8x128xf32>
    %c64_i32_55 = arith.constant 64 : i32
    %167 = tpu.dynamic_rotate %165 by %c64_i32_55 dim 1 : vector<8x128xf32>, i32 -> vector<8x128xf32>
    %c32_i32_56 = arith.constant 32 : i32
    %168 = tpu.dynamic_rotate %165 by %c32_i32_56 dim 1 : vector<8x128xf32>, i32 -> vector<8x128xf32>
    %169 = arith.mulf %166, %154 : vector<8x128xf32>
    %cst_57 = arith.constant 2.000000e+00 : f32
    %170 = vector.broadcast %cst_57 : f32 to vector<8x128xf32>
    %171 = arith.mulf %170, %167 : vector<8x128xf32>
    %cst_58 = arith.constant 1.000000e+00 : f32
    %172 = vector.broadcast %cst_58 : f32 to vector<8x128xf32>
    %173 = arith.subf %171, %172 : vector<8x128xf32>
    %174 = arith.mulf %165, %173 : vector<8x128xf32>
    %175 = arith.addf %169, %174 : vector<8x128xf32>
    %176 = math.tanh %175 : vector<8x128xf32>
    %177 = arith.mulf %168, %176 : vector<8x128xf32>
    %178 = tpu.iota {dimensions = array<i32: 0>} : vector<8x128xi32>
    %c2_i32 = arith.constant 2 : i32
    %179 = vector.broadcast %c2_i32 : i32 to vector<8x128xi32>
    %180 = arith.cmpi slt, %178, %179 : vector<8x128xi32>
    %cst_59 = arith.constant 5.000000e-01 : f32
    %cst_60 = arith.constant 0.000000e+00 : f32
    %181 = vector.broadcast %cst_59 : f32 to vector<8x128xf32>
    %182 = vector.broadcast %cst_60 : f32 to vector<8x128xf32>
    %183 = arith.select %180, %181, %182 : vector<8x128xi1>, vector<8x128xf32>
    %184 = arith.mulf %177, %183 : vector<8x128xf32>
    %cst_61 = arith.constant dense<0.000000e+00> : vector<128xf32>
    %185 = vector.multi_reduction <add>, %184, %cst_61 [0] : vector<8x128xf32> to vector<128xf32>
    %186 = vector.shape_cast %185 : vector<128xf32> to vector<1x128xf32>
    %187 = vector.extract_strided_slice %186 {offsets = [0, 0], sizes = [1, 32], strides = [1, 1]} : vector<1x128xf32> to vector<1x32xf32>
    %c0_62 = arith.constant 0 : index
    %c0_63 = arith.constant 0 : index
    %188 = vector.load %arg3[%c0_62, %c0_63] : memref<1x32xf32, #tpu.memory_space<vmem>>, vector<1x32xf32>
    tpu.vector_store %arg3[%c0_62, %c0_63], %187 {strides = array<i32>} : memref<1x32xf32, #tpu.memory_space<vmem>>, vector<1x32xf32>,
    return
  }
}

</mosaic_0001>

<llo_original>
// kernel: tpu_custom_call.1
$region0: #{tpu_custom_call.1}
  #allocation0 [shape = 'u32[]', space=smem, size = 0x4, offset = 0x4, fixed_abs, tag = 'smem constant byte address 0x4 - core index']
  #allocation1 [shape = 'u32[144,128]{1,0:T(1,128)}', space=vmem, size = 0x12000, scoped, tag = 'internal scratch']
  %s0 = inlined_call_operand.vmem [shape: bf16[64,16], index: 0, kind: input, shape index: {}]
  %s1 = inlined_call_operand.hbm [shape: bf16[144,128], index: 1, kind: input, shape index: {}]
  %s2 = inlined_call_operand.vmem [shape: f32[24,128], index: 2, kind: input, shape index: {}]
  %s3 = inlined_call_operand.hbm [shape: f32[1,32], index: 3, kind: output, shape index: {}]
  %s4 = sld [smem:[#allocation0]]
  $region26: #{tpu_custom_call.1} parent=0
    _
  %s6 = ssub.s32 1, %s4
  %s7 = scalar_select 0, %s6, %s4
  $region1: #{tpu_custom_call.1} parent=0
    #allocation2 [shape = 'u8[36864]{0}', space=vmem, size = 0x9000, scoped, tag = 'input window, operand 1, single buffered']
    #allocation3 [shape = 's32[1]{0}', space=sflag, size = 0x4, scoped, tag = 'scoped memory for tpu_custom_call.1']
    #allocation4 [shape = 's32[1]{0}', space=sflag, size = 0x4, scoped, tag = 'scoped memory for tpu_custom_call.1']
    #allocation5 [shape = 'u8[512]{0}', space=vmem, size = 0x400, scoped, tag = 'output window, operand 0, single buffered']
    %8 = vsyncpa [#allocation3], 0
    %9 = vsyncpa [#allocation4], 0
    // Predicated region
    $region2: #{tpu_custom_call.1} parent=1 // pred_check
      _
    $region3: #{tpu_custom_call.1} parent=1 // pred_check_branch
      %11 = sbr.rel (0) target = $region5
    $region4: #{tpu_custom_call.1} parent=1 // pred_region
      _
    $region5: #{tpu_custom_call.1} parent=1 // pred_fallthru
      _
    // Predicated region
    $region6: #{tpu_custom_call.1} parent=1 // pred_check
      _
    $region7: #{tpu_custom_call.1} parent=1 // pred_check_branch
      %13 = sbr.rel (0) target = $region9
    $region8: #{tpu_custom_call.1} parent=1 // pred_region
      %s15 = ssub.s32 1152, 1152
      %16 = vsyncadd [#allocation3], %s15
      %s17 = sshll.u32 [#allocation2], 4
      %s18 = int_to_ptr.vmem [resolvable:$true] %s17
      %23 = dma.hbm_to_vmem [thread:$0]  %s1, 1152, %s18, [#allocation3], 64, 64, 4
    $region9: #{tpu_custom_call.1} parent=1 // pred_fallthru
      _
    // Predicated region
    $region10: #{tpu_custom_call.1} parent=1 // pred_check
      _
    $region11: #{tpu_custom_call.1} parent=1 // pred_check_branch
      %25 = sbr.rel (0) target = $region13
    $region12: #{tpu_custom_call.1} parent=1 // pred_region
      _
    $region13: #{tpu_custom_call.1} parent=1 // pred_fallthru
      _
    // Predicated region
    $region14: #{tpu_custom_call.1} parent=1 // pred_check
      _
    $region15: #{tpu_custom_call.1} parent=1 // pred_check_branch
      %27 = sbr.rel (0) target = $region17
    $region16: #{tpu_custom_call.1} parent=1 // pred_region
      %28 = dma.done [#allocation3], 1152
    $region17: #{tpu_custom_call.1} parent=1 // pred_fallthru
      _
    %v30 = vld [vmem:[#allocation2] sm:$0xf]
    %v31 = vld [vmem:[#allocation2 + $0x4] sm:$0xf]
    %v32 = vld [vmem:[#allocation2 + $0x8] sm:$0xf]
    %v33 = vld [vmem:[#allocation2 + $0xc] sm:$0xf]
    %v34 = vld [vmem:[#allocation2 + $0x10] sm:$0xf]
    %v35 = vld [vmem:[#allocation2 + $0x14] sm:$0xf]
    %v36 = vld [vmem:[#allocation2 + $0x18] sm:$0xf]
    %v37 = vld [vmem:[#allocation2 + $0x1c] sm:$0xf]
    %v38 = vld [vmem:[#allocation2 + $0x20] sm:$0xf]
    %v39 = vld [vmem:[#allocation2 + $0x24] sm:$0xf]
    %v40 = vld [vmem:[#allocation2 + $0x28] sm:$0xf]
    %v41 = vld [vmem:[#allocation2 + $0x2c] sm:$0xf]
    %v42 = vld [vmem:[#allocation2 + $0x30] sm:$0xf]
    %v43 = vld [vmem:[#allocation2 + $0x34] sm:$0xf]
    %v44 = vld [vmem:[#allocation2 + $0x38] sm:$0xf]
    %v45 = vld [vmem:[#allocation2 + $0x3c] sm:$0xf]
    %v46 = vld [vmem:[#allocation2 + $0x40] sm:$0xf]
    %v47 = vld [vmem:[#allocation2 + $0x44] sm:$0xf]
    %v48 = vld [vmem:[%s2] sm:$0xff]
    %v49 = vld [vmem:[%s2 + $0x8] sm:$0xff]
    %v50 = vld [vmem:[%s2 + $0x10] sm:$0xff]
    %v51 = vld [vmem:[%s0] sm:$0xf]
    %v52 = vld [vmem:[%s0 + $0x4] sm:$0xf]
    %v53 = vld [vmem:[%s0 + $0x8] sm:$0xf]
    %v54 = vld [vmem:[%s0 + $0xc] sm:$0xf]
    %v55 = vld [vmem:[%s0 + $0x10] sm:$0xf]
    %v56 = vld [vmem:[%s0 + $0x14] sm:$0xf]
    %v57 = vld [vmem:[%s0 + $0x18] sm:$0xf]
    %v58 = vld [vmem:[%s0 + $0x1c] sm:$0xf]
    %v59 = vlaneseq
    %v60 = vshrl.u32 %v59, 7
    %v61 = vsub.s32 0, %v60
    %v62 = vrot.slane %v50, %v61
    %v71 = vunpack.c.l.b16 %v51
    %v72 = vunpack.c.l.b16 %v52
    %v73 = vunpack.c.l.b16 %v53
    %v74 = vunpack.c.l.b16 %v54
    %v75 = vunpack.c.l.b16 %v55
    %v76 = vunpack.c.l.b16 %v56
    %v77 = vunpack.c.l.b16 %v57
    %v78 = vunpack.c.l.b16 %v58
    %v79 = vpack.c.b16 %v72, %v71
    %v80 = vpack.c.b16 %v74, %v73
    %v81 = vpack.c.b16 %v76, %v75
    %v82 = vpack.c.b16 %v78, %v77
    %v85 = vunpack.c.l.b16 %v30
    %v86 = vunpack.c.l.b16 %v31
    %v87 = vpack.c.b16 %v86, %v85
    %vm89 = vcmask 130048
    %v91 = vsel %vm89, %v79, 0
    %v94 = vsel %vm89, %v80, 0
    %v97 = vsel %vm89, %v81, 0
    %v100 = vsel %vm89, %v82, 0
    %102 = vmatprep.subr.bf16.mxu0 0
    %103 = vmatpush1.bf16.msra.mxu0 %v87
    %104 = vmatprep.subr.bf16.mxu0 0
    %105 = vmatpush1.bf16.msra.mxu0 0
    %106 = vmatprep.subr.bf16.mxu0 0
    %107 = vmatpush1.bf16.msra.mxu0 0
    %108 = vmatprep.subr.bf16.mxu0 0
    %109 = vmatpush1.bf16.msra.mxu0 0
    %110 = vmatprep.subr.bf16.mxu0 0
    %111 = vmatpush1.bf16.msra.mxu0 0
    %112 = vmatprep.subr.bf16.mxu0 0
    %113 = vmatpush1.bf16.msra.mxu0 0
    %114 = vmatprep.subr.bf16.mxu0 0
    %115 = vmatpush1.bf16.msra.mxu0 0
    %116 = vmatprep.subr.bf16.mxu0 0
    %117 = vmatpush1.bf16.msra.mxu0 0
    %118 = vmatprep.subr.bf16.mxu0 0
    %119 = vmatpush1.bf16.msra.mxu0 0
    %120 = vmatprep.subr.bf16.mxu0 0
    %121 = vmatpush1.bf16.msra.mxu0 0
    %122 = vmatprep.subr.bf16.mxu0 0
    %123 = vmatpush1.bf16.msra.mxu0 0
    %124 = vmatprep.subr.bf16.mxu0 0
    %125 = vmatpush1.bf16.msra.mxu0 0
    %126 = vmatprep.subr.bf16.mxu0 0
    %127 = vmatpush1.bf16.msra.mxu0 0
    %128 = vmatprep.subr.bf16.mxu0 0
    %129 = vmatpush1.bf16.msra.mxu0 0
    %130 = vmatprep.subr.bf16.mxu0 0
    %131 = vmatpush1.bf16.msra.mxu0 0
    %132 = vmatprep.subr.bf16.mxu0 0
    %133 = vmatpush1.bf16.msra.mxu0 0
    %134 = vmatprep.mubr.bf16.mxu0 0
    %135 = vmatmul.mubr.bf16.gmra.mrb[0].mxu0 %v91
    %v136 = vpop.f32.mrb[0].mxu0
    %v137 = vadd.f32 %v62, %v136
    %v138 = vpop.f32.mrb[0].mxu0
    %v139 = vpop.f32.mrb[0].mxu0
    %v140 = vadd.f32 %v62, %v139
    %v141 = vpop.f32.mrb[0].mxu0
    %142 = vmatprep.mubr.bf16.mxu0 0
    %143 = vmatmul.mubr.bf16.gmra.mrb[0].mxu0 %v94
    %v144 = vpop.f32.mrb[0].mxu0
    %v145 = vadd.f32 %v62, %v144
    %v146 = vpop.f32.mrb[0].mxu0
    %v147 = vpop.f32.mrb[0].mxu0
    %v148 = vadd.f32 %v62, %v147
    %v149 = vpop.f32.mrb[0].mxu0
    %150 = vmatprep.mubr.bf16.mxu0 0
    %151 = vmatmul.mubr.bf16.gmra.mrb[0].mxu0 %v97
    %v152 = vpop.f32.mrb[0].mxu0
    %v153 = vadd.f32 %v62, %v152
    %v154 = vpop.f32.mrb[0].mxu0
    %v155 = vpop.f32.mrb[0].mxu0
    %v156 = vadd.f32 %v62, %v155
    %v157 = vpop.f32.mrb[0].mxu0
    %158 = vmatprep.mubr.bf16.mxu0 0
    %159 = vmatmul.mubr.bf16.gmra.mrb[0].mxu0 %v100
    %v160 = vpop.f32.mrb[0].mxu0
    %v161 = vadd.f32 %v62, %v160
    %v162 = vpop.f32.mrb[0].mxu0
    %v163 = vpop.f32.mrb[0].mxu0
    %v164 = vadd.f32 %v62, %v163
    %v165 = vpop.f32.mrb[0].mxu0
    %166 = vdwg.mxu0
    %v167 = vpack.c.bf16 %v48, %v48
    %v184 = vunpack.c.l.b16 %v32
    %v185 = vunpack.c.l.b16 %v33
    %v186 = vunpack.c.l.b16 %v34
    %v187 = vunpack.c.l.b16 %v35
    %v188 = vunpack.c.l.b16 %v36
    %v189 = vunpack.c.l.b16 %v37
    %v190 = vunpack.c.l.b16 %v38
    %v191 = vunpack.c.l.b16 %v39
    %v192 = vunpack.c.l.b16 %v40
    %v193 = vunpack.c.l.b16 %v41
    %v194 = vunpack.c.l.b16 %v42
    %v195 = vunpack.c.l.b16 %v43
    %v196 = vunpack.c.l.b16 %v44
    %v197 = vunpack.c.l.b16 %v45
    %v198 = vunpack.c.l.b16 %v46
    %v199 = vunpack.c.l.b16 %v47
    %v200 = vpack.c.b16 %v185, %v184
    %v201 = vpack.c.b16 %v187, %v186
    %v202 = vpack.c.b16 %v189, %v188
    %v203 = vpack.c.b16 %v191, %v190
    %v204 = vpack.c.b16 %v193, %v192
    %v205 = vpack.c.b16 %v195, %v194
    %v206 = vpack.c.b16 %v197, %v196
    %v207 = vpack.c.b16 %v199, %v198
    %216 = vmatprep.subr.bf16.mxu0 0
    %217 = vmatpush1.bf16.msra.mxu0 %v200
    %218 = vmatprep.subr.bf16.mxu0 0
    %219 = vmatpush1.bf16.msra.mxu0 %v201
    %220 = vmatprep.subr.bf16.mxu0 0
    %221 = vmatpush1.bf16.msra.mxu0 %v202
    %222 = vmatprep.subr.bf16.mxu0 0
    %223 = vmatpush1.bf16.msra.mxu0 %v203
    %224 = vmatprep.subr.bf16.mxu0 0
    %225 = vmatpush1.bf16.msra.mxu0 %v204
    %226 = vmatprep.subr.bf16.mxu0 0
    %227 = vmatpush1.bf16.msra.mxu0 %v205
    %228 = vmatprep.subr.bf16.mxu0 0
    %229 = vmatpush1.bf16.msra.mxu0 %v206
    %230 = vmatprep.subr.bf16.mxu0 0
    %231 = vmatpush1.bf16.msra.mxu0 %v207
    %232 = vmatprep.subr.bf16.mxu0 0
    %233 = vmatpush1.bf16.msra.mxu0 0
    %234 = vmatprep.subr.bf16.mxu0 0
    %235 = vmatpush1.bf16.msra.mxu0 0
    %236 = vmatprep.subr.bf16.mxu0 0
    %237 = vmatpush1.bf16.msra.mxu0 0
    %238 = vmatprep.subr.bf16.mxu0 0
    %239 = vmatpush1.bf16.msra.mxu0 0
    %240 = vmatprep.subr.bf16.mxu0 0
    %241 = vmatpush1.bf16.msra.mxu0 0
    %242 = vmatprep.subr.bf16.mxu0 0
    %243 = vmatpush1.bf16.msra.mxu0 0
    %244 = vmatprep.subr.bf16.mxu0 0
    %245 = vmatpush1.bf16.msra.mxu0 0
    %246 = vmatprep.subr.bf16.mxu0 0
    %247 = vmatpush1.bf16.msra.mxu0 0
    %248 = vmatprep.mubr.bf16.mxu0 0
    %249 = vmatmul.mubr.bf16.gmra.mrb[0].mxu0 %v167
    %v250 = vpop.f32.mrb[0].mxu0
    %v251 = vadd.f32 0.0, %v250
    %v252 = vpop.f32.mrb[0].mxu0
    %v253 = vpop.f32.mrb[0].mxu0
    %v254 = vpop.f32.mrb[0].mxu0
    %255 = vdwg.mxu0
    %v256 = vadd.f32 %v137, %v251
    %v257 = vxor.u32 %v256, 2147483648
    %v258 = vmul.f32 %v257, 1.442695
    %v259 = vpow.pop %v258
    %v260 = vadd.f32 %v259, 1.0
    %v261 = vrcp.pop %v260
    %v262 = vmul.f32 1.0, %v261
    %263 = vrot.lane.b32.xlu0 %v262, 96
    %v264 = vpop.permute.xlu0 %263
    %265 = vrot.lane.b32.xlu0 %v262, 64
    %v266 = vpop.permute.xlu0 %265
    %267 = vrot.lane.b32.xlu0 %v262, 32
    %v268 = vpop.permute.xlu0 %267
    %v269 = vmul.f32 %v264, %v49
    %v270 = vmul.f32 %v266, 2.0
    %v271 = vsub.f32 %v270, 1.0
    %v272 = vmul.f32 %v262, %v271
    %v273 = vadd.f32 %v269, %v272
    %v274 = vtanh.pop %v273
    %v275 = vmul.f32 %v268, %v274
    %v276 = vpack.c.bf16 %v275, %v275
    %277 = vmatprep.subr.bf16.mxu0 0
    %278 = vmatpush1.bf16.msra.mxu0 %v200
    %279 = vmatprep.subr.bf16.mxu0 0
    %280 = vmatpush1.bf16.msra.mxu0 %v201
    %281 = vmatprep.subr.bf16.mxu0 0
    %282 = vmatpush1.bf16.msra.mxu0 %v202
    %283 = vmatprep.subr.bf16.mxu0 0
    %284 = vmatpush1.bf16.msra.mxu0 %v203
    %285 = vmatprep.subr.bf16.mxu0 0
    %286 = vmatpush1.bf16.msra.mxu0 %v204
    %287 = vmatprep.subr.bf16.mxu0 0
    %288 = vmatpush1.bf16.msra.mxu0 %v205
    %289 = vmatprep.subr.bf16.mxu0 0
    %290 = vmatpush1.bf16.msra.mxu0 %v206
    %291 = vmatprep.subr.bf16.mxu0 0
    %292 = vmatpush1.bf16.msra.mxu0 %v207
    %293 = vmatprep.subr.bf16.mxu0 0
    %294 = vmatpush1.bf16.msra.mxu0 0
    %295 = vmatprep.subr.bf16.mxu0 0
    %296 = vmatpush1.bf16.msra.mxu0 0
    %297 = vmatprep.subr.bf16.mxu0 0
    %298 = vmatpush1.bf16.msra.mxu0 0
    %299 = vmatprep.subr.bf16.mxu0 0
    %300 = vmatpush1.bf16.msra.mxu0 0
    %301 = vmatprep.subr.bf16.mxu0 0
    %302 = vmatpush1.bf16.msra.mxu0 0
    %303 = vmatprep.subr.bf16.mxu0 0
    %304 = vmatpush1.bf16.msra.mxu0 0
    %305 = vmatprep.subr.bf16.mxu0 0
    %306 = vmatpush1.bf16.msra.mxu0 0
    %307 = vmatprep.subr.bf16.mxu0 0
    %308 = vmatpush1.bf16.msra.mxu0 0
    %309 = vmatprep.mubr.bf16.mxu0 0
    %310 = vmatmul.mubr.bf16.gmra.mrb[0].mxu0 %v276
    %v311 = vpop.f32.mrb[0].mxu0
    %v312 = vadd.f32 0.0, %v311
    %v313 = vpop.f32.mrb[0].mxu0
    %v314 = vpop.f32.mrb[0].mxu0
    %v315 = vpop.f32.mrb[0].mxu0
    %316 = vdwg.mxu0
    %v317 = vadd.f32 %v140, %v312
    %v318 = vxor.u32 %v317, 2147483648
    %v319 = vmul.f32 %v318, 1.442695
    %v320 = vpow.pop %v319
    %v321 = vadd.f32 %v320, 1.0
    %v322 = vrcp.pop %v321
    %v323 = vmul.f32 1.0, %v322
    %324 = vrot.lane.b32.xlu0 %v323, 96
    %v325 = vpop.permute.xlu0 %324
    %326 = vrot.lane.b32.xlu0 %v323, 64
    %v327 = vpop.permute.xlu0 %326
    %328 = vrot.lane.b32.xlu0 %v323, 32
    %v329 = vpop.permute.xlu0 %328
    %v330 = vmul.f32 %v325, %v273
    %v331 = vmul.f32 %v327, 2.0
    %v332 = vsub.f32 %v331, 1.0
    %v333 = vmul.f32 %v323, %v332
    %v334 = vadd.f32 %v330, %v333
    %v335 = vtanh.pop %v334
    %v336 = vmul.f32 %v329, %v335
    %v337 = vpack.c.bf16 %v336, %v336
    %338 = vmatprep.subr.bf16.mxu0 0
    %339 = vmatpush1.bf16.msra.mxu0 %v200
    %340 = vmatprep.subr.bf16.mxu0 0
    %341 = vmatpush1.bf16.msra.mxu0 %v201
    %342 = vmatprep.subr.bf16.mxu0 0
    %343 = vmatpush1.bf16.msra.mxu0 %v202
    %344 = vmatprep.subr.bf16.mxu0 0
    %345 = vmatpush1.bf16.msra.mxu0 %v203
    %346 = vmatprep.subr.bf16.mxu0 0
    %347 = vmatpush1.bf16.msra.mxu0 %v204
    %348 = vmatprep.subr.bf16.mxu0 0
    %349 = vmatpush1.bf16.msra.mxu0 %v205
    %350 = vmatprep.subr.bf16.mxu0 0
    %351 = vmatpush1.bf16.msra.mxu0 %v206
    %352 = vmatprep.subr.bf16.mxu0 0
    %353 = vmatpush1.bf16.msra.mxu0 %v207
    %354 = vmatprep.subr.bf16.mxu0 0
    %355 = vmatpush1.bf16.msra.mxu0 0
    %356 = vmatprep.subr.bf16.mxu0 0
    %357 = vmatpush1.bf16.msra.mxu0 0
    %358 = vmatprep.subr.bf16.mxu0 0
    %359 = vmatpush1.bf16.msra.mxu0 0
    %360 = vmatprep.subr.bf16.mxu0 0
    %361 = vmatpush1.bf16.msra.mxu0 0
    %362 = vmatprep.subr.bf16.mxu0 0
    %363 = vmatpush1.bf16.msra.mxu0 0
    %364 = vmatprep.subr.bf16.mxu0 0
    %365 = vmatpush1.bf16.msra.mxu0 0
    %366 = vmatprep.subr.bf16.mxu0 0
    %367 = vmatpush1.bf16.msra.mxu0 0
    %368 = vmatprep.subr.bf16.mxu0 0
    %369 = vmatpush1.bf16.msra.mxu0 0
    %370 = vmatprep.mubr.bf16.mxu0 0
    %371 = vmatmul.mubr.bf16.gmra.mrb[0].mxu0 %v337
    %v372 = vpop.f32.mrb[0].mxu0
    %v373 = vadd.f32 0.0, %v372
    %v374 = vpop.f32.mrb[0].mxu0
    %v375 = vpop.f32.mrb[0].mxu0
    %v376 = vpop.f32.mrb[0].mxu0
    %377 = vdwg.mxu0
    %v378 = vadd.f32 %v145, %v373
    %v379 = vxor.u32 %v378, 2147483648
    %v380 = vmul.f32 %v379, 1.442695
    %v381 = vpow.pop %v380
    %v382 = vadd.f32 %v381, 1.0
    %v383 = vrcp.pop %v382
    %v384 = vmul.f32 1.0, %v383
    %385 = vrot.lane.b32.xlu0 %v384, 96
    %v386 = vpop.permute.xlu0 %385
    %387 = vrot.lane.b32.xlu0 %v384, 64
    %v388 = vpop.permute.xlu0 %387
    %389 = vrot.lane.b32.xlu0 %v384, 32
    %v390 = vpop.permute.xlu0 %389
    %v391 = vmul.f32 %v386, %v334
    %v392 = vmul.f32 %v388, 2.0
    %v393 = vsub.f32 %v392, 1.0
    %v394 = vmul.f32 %v384, %v393
    %v395 = vadd.f32 %v391, %v394
    %v396 = vtanh.pop %v395
    %v397 = vmul.f32 %v390, %v396
    %v398 = vpack.c.bf16 %v397, %v397
    %399 = vmatprep.subr.bf16.mxu0 0
    %400 = vmatpush1.bf16.msra.mxu0 %v200
    %401 = vmatprep.subr.bf16.mxu0 0
    %402 = vmatpush1.bf16.msra.mxu0 %v201
    %403 = vmatprep.subr.bf16.mxu0 0
    %404 = vmatpush1.bf16.msra.mxu0 %v202
    %405 = vmatprep.subr.bf16.mxu0 0
    %406 = vmatpush1.bf16.msra.mxu0 %v203
    %407 = vmatprep.subr.bf16.mxu0 0
    %408 = vmatpush1.bf16.msra.mxu0 %v204
    %409 = vmatprep.subr.bf16.mxu0 0
    %410 = vmatpush1.bf16.msra.mxu0 %v205
    %411 = vmatprep.subr.bf16.mxu0 0
    %412 = vmatpush1.bf16.msra.mxu0 %v206
    %413 = vmatprep.subr.bf16.mxu0 0
    %414 = vmatpush1.bf16.msra.mxu0 %v207
    %415 = vmatprep.subr.bf16.mxu0 0
    %416 = vmatpush1.bf16.msra.mxu0 0
    %417 = vmatprep.subr.bf16.mxu0 0
    %418 = vmatpush1.bf16.msra.mxu0 0
    %419 = vmatprep.subr.bf16.mxu0 0
    %420 = vmatpush1.bf16.msra.mxu0 0
    %421 = vmatprep.subr.bf16.mxu0 0
    %422 = vmatpush1.bf16.msra.mxu0 0
    %423 = vmatprep.subr.bf16.mxu0 0
    %424 = vmatpush1.bf16.msra.mxu0 0
    %425 = vmatprep.subr.bf16.mxu0 0
    %426 = vmatpush1.bf16.msra.mxu0 0
    %427 = vmatprep.subr.bf16.mxu0 0
    %428 = vmatpush1.bf16.msra.mxu0 0
    %429 = vmatprep.subr.bf16.mxu0 0
    %430 = vmatpush1.bf16.msra.mxu0 0
    %431 = vmatprep.mubr.bf16.mxu0 0
    %432 = vmatmul.mubr.bf16.gmra.mrb[0].mxu0 %v398
    %v433 = vpop.f32.mrb[0].mxu0
    %v434 = vadd.f32 0.0, %v433
    %v435 = vpop.f32.mrb[0].mxu0
    %v436 = vpop.f32.mrb[0].mxu0
    %v437 = vpop.f32.mrb[0].mxu0
    %438 = vdwg.mxu0
    %v439 = vadd.f32 %v148, %v434
    %v440 = vxor.u32 %v439, 2147483648
    %v441 = vmul.f32 %v440, 1.442695
    %v442 = vpow.pop %v441
    %v443 = vadd.f32 %v442, 1.0
    %v444 = vrcp.pop %v443
    %v445 = vmul.f32 1.0, %v444
    %446 = vrot.lane.b32.xlu0 %v445, 96
    %v447 = vpop.permute.xlu0 %446
    %448 = vrot.lane.b32.xlu0 %v445, 64
    %v449 = vpop.permute.xlu0 %448
    %450 = vrot.lane.b32.xlu0 %v445, 32
    %v451 = vpop.permute.xlu0 %450
    %v452 = vmul.f32 %v447, %v395
    %v453 = vmul.f32 %v449, 2.0
    %v454 = vsub.f32 %v453, 1.0
    %v455 = vmul.f32 %v445, %v454
    %v456 = vadd.f32 %v452, %v455
    %v457 = vtanh.pop %v456
    %v458 = vmul.f32 %v451, %v457
    %v459 = vpack.c.bf16 %v458, %v458
    %460 = vmatprep.subr.bf16.mxu0 0
    %461 = vmatpush1.bf16.msra.mxu0 %v200
    %462 = vmatprep.subr.bf16.mxu0 0
    %463 = vmatpush1.bf16.msra.mxu0 %v201
    %464 = vmatprep.subr.bf16.mxu0 0
    %465 = vmatpush1.bf16.msra.mxu0 %v202
    %466 = vmatprep.subr.bf16.mxu0 0
    %467 = vmatpush1.bf16.msra.mxu0 %v203
    %468 = vmatprep.subr.bf16.mxu0 0
    %469 = vmatpush1.bf16.msra.mxu0 %v204
    %470 = vmatprep.subr.bf16.mxu0 0
    %471 = vmatpush1.bf16.msra.mxu0 %v205
    %472 = vmatprep.subr.bf16.mxu0 0
    %473 = vmatpush1.bf16.msra.mxu0 %v206
    %474 = vmatprep.subr.bf16.mxu0 0
    %475 = vmatpush1.bf16.msra.mxu0 %v207
    %476 = vmatprep.subr.bf16.mxu0 0
    %477 = vmatpush1.bf16.msra.mxu0 0
    %478 = vmatprep.subr.bf16.mxu0 0
    %479 = vmatpush1.bf16.msra.mxu0 0
    %480 = vmatprep.subr.bf16.mxu0 0
    %481 = vmatpush1.bf16.msra.mxu0 0
    %482 = vmatprep.subr.bf16.mxu0 0
    %483 = vmatpush1.bf16.msra.mxu0 0
    %484 = vmatprep.subr.bf16.mxu0 0
    %485 = vmatpush1.bf16.msra.mxu0 0
    %486 = vmatprep.subr.bf16.mxu0 0
    %487 = vmatpush1.bf16.msra.mxu0 0
    %488 = vmatprep.subr.bf16.mxu0 0
    %489 = vmatpush1.bf16.msra.mxu0 0
    %490 = vmatprep.subr.bf16.mxu0 0
    %491 = vmatpush1.bf16.msra.mxu0 0
    %492 = vmatprep.mubr.bf16.mxu0 0
    %493 = vmatmul.mubr.bf16.gmra.mrb[0].mxu0 %v459
    %v494 = vpop.f32.mrb[0].mxu0
    %v495 = vadd.f32 0.0, %v494
    %v496 = vpop.f32.mrb[0].mxu0
    %v497 = vpop.f32.mrb[0].mxu0
    %v498 = vpop.f32.mrb[0].mxu0
    %499 = vdwg.mxu0
    %v500 = vadd.f32 %v153, %v495
    %v501 = vxor.u32 %v500, 2147483648
    %v502 = vmul.f32 %v501, 1.442695
    %v503 = vpow.pop %v502
    %v504 = vadd.f32 %v503, 1.0
    %v505 = vrcp.pop %v504
    %v506 = vmul.f32 1.0, %v505
    %507 = vrot.lane.b32.xlu0 %v506, 96
    %v508 = vpop.permute.xlu0 %507
    %509 = vrot.lane.b32.xlu0 %v506, 64
    %v510 = vpop.permute.xlu0 %509
    %511 = vrot.lane.b32.xlu0 %v506, 32
    %v512 = vpop.permute.xlu0 %511
    %v513 = vmul.f32 %v508, %v456
    %v514 = vmul.f32 %v510, 2.0
    %v515 = vsub.f32 %v514, 1.0
    %v516 = vmul.f32 %v506, %v515
    %v517 = vadd.f32 %v513, %v516
    %v518 = vtanh.pop %v517
    %v519 = vmul.f32 %v512, %v518
    %v520 = vpack.c.bf16 %v519, %v519
    %521 = vmatprep.subr.bf16.mxu0 0
    %522 = vmatpush1.bf16.msra.mxu0 %v200
    %523 = vmatprep.subr.bf16.mxu0 0
    %524 = vmatpush1.bf16.msra.mxu0 %v201
    %525 = vmatprep.subr.bf16.mxu0 0
    %526 = vmatpush1.bf16.msra.mxu0 %v202
    %527 = vmatprep.subr.bf16.mxu0 0
    %528 = vmatpush1.bf16.msra.mxu0 %v203
    %529 = vmatprep.subr.bf16.mxu0 0
    %530 = vmatpush1.bf16.msra.mxu0 %v204
    %531 = vmatprep.subr.bf16.mxu0 0
    %532 = vmatpush1.bf16.msra.mxu0 %v205
    %533 = vmatprep.subr.bf16.mxu0 0
    %534 = vmatpush1.bf16.msra.mxu0 %v206
    %535 = vmatprep.subr.bf16.mxu0 0
    %536 = vmatpush1.bf16.msra.mxu0 %v207
    %537 = vmatprep.subr.bf16.mxu0 0
    %538 = vmatpush1.bf16.msra.mxu0 0
    %539 = vmatprep.subr.bf16.mxu0 0
    %540 = vmatpush1.bf16.msra.mxu0 0
    %541 = vmatprep.subr.bf16.mxu0 0
    %542 = vmatpush1.bf16.msra.mxu0 0
    %543 = vmatprep.subr.bf16.mxu0 0
    %544 = vmatpush1.bf16.msra.mxu0 0
    %545 = vmatprep.subr.bf16.mxu0 0
    %546 = vmatpush1.bf16.msra.mxu0 0
    %547 = vmatprep.subr.bf16.mxu0 0
    %548 = vmatpush1.bf16.msra.mxu0 0
    %549 = vmatprep.subr.bf16.mxu0 0
    %550 = vmatpush1.bf16.msra.mxu0 0
    %551 = vmatprep.subr.bf16.mxu0 0
    %552 = vmatpush1.bf16.msra.mxu0 0
    %553 = vmatprep.mubr.bf16.mxu0 0
    %554 = vmatmul.mubr.bf16.gmra.mrb[0].mxu0 %v520
    %v555 = vpop.f32.mrb[0].mxu0
    %v556 = vadd.f32 0.0, %v555
    %v557 = vpop.f32.mrb[0].mxu0
    %v558 = vpop.f32.mrb[0].mxu0
    %v559 = vpop.f32.mrb[0].mxu0
    %560 = vdwg.mxu0
    %v561 = vadd.f32 %v156, %v556
    %v562 = vxor.u32 %v561, 2147483648
    %v563 = vmul.f32 %v562, 1.442695
    %v564 = vpow.pop %v563
    %v565 = vadd.f32 %v564, 1.0
    %v566 = vrcp.pop %v565
    %v567 = vmul.f32 1.0, %v566
    %568 = vrot.lane.b32.xlu0 %v567, 96
    %v569 = vpop.permute.xlu0 %568
    %570 = vrot.lane.b32.xlu0 %v567, 64
    %v571 = vpop.permute.xlu0 %570
    %572 = vrot.lane.b32.xlu0 %v567, 32
    %v573 = vpop.permute.xlu0 %572
    %v574 = vmul.f32 %v569, %v517
    %v575 = vmul.f32 %v571, 2.0
    %v576 = vsub.f32 %v575, 1.0
    %v577 = vmul.f32 %v567, %v576
    %v578 = vadd.f32 %v574, %v577
    %v579 = vtanh.pop %v578
    %v580 = vmul.f32 %v573, %v579
    %v581 = vpack.c.bf16 %v580, %v580
    %582 = vmatprep.subr.bf16.mxu0 0
    %583 = vmatpush1.bf16.msra.mxu0 %v200
    %584 = vmatprep.subr.bf16.mxu0 0
    %585 = vmatpush1.bf16.msra.mxu0 %v201
    %586 = vmatprep.subr.bf16.mxu0 0
    %587 = vmatpush1.bf16.msra.mxu0 %v202
    %588 = vmatprep.subr.bf16.mxu0 0
    %589 = vmatpush1.bf16.msra.mxu0 %v203
    %590 = vmatprep.subr.bf16.mxu0 0
    %591 = vmatpush1.bf16.msra.mxu0 %v204
    %592 = vmatprep.subr.bf16.mxu0 0
    %593 = vmatpush1.bf16.msra.mxu0 %v205
    %594 = vmatprep.subr.bf16.mxu0 0
    %595 = vmatpush1.bf16.msra.mxu0 %v206
    %596 = vmatprep.subr.bf16.mxu0 0
    %597 = vmatpush1.bf16.msra.mxu0 %v207
    %598 = vmatprep.subr.bf16.mxu0 0
    %599 = vmatpush1.bf16.msra.mxu0 0
    %600 = vmatprep.subr.bf16.mxu0 0
    %601 = vmatpush1.bf16.msra.mxu0 0
    %602 = vmatprep.subr.bf16.mxu0 0
    %603 = vmatpush1.bf16.msra.mxu0 0
    %604 = vmatprep.subr.bf16.mxu0 0
    %605 = vmatpush1.bf16.msra.mxu0 0
    %606 = vmatprep.subr.bf16.mxu0 0
    %607 = vmatpush1.bf16.msra.mxu0 0
    %608 = vmatprep.subr.bf16.mxu0 0
    %609 = vmatpush1.bf16.msra.mxu0 0
    %610 = vmatprep.subr.bf16.mxu0 0
    %611 = vmatpush1.bf16.msra.mxu0 0
    %612 = vmatprep.subr.bf16.mxu0 0
    %613 = vmatpush1.bf16.msra.mxu0 0
    %614 = vmatprep.mubr.bf16.mxu0 0
    %615 = vmatmul.mubr.bf16.gmra.mrb[0].mxu0 %v581
    %v616 = vpop.f32.mrb[0].mxu0
    %v617 = vadd.f32 0.0, %v616
    %v618 = vpop.f32.mrb[0].mxu0
    %v619 = vpop.f32.mrb[0].mxu0
    %v620 = vpop.f32.mrb[0].mxu0
    %621 = vdwg.mxu0
    %v622 = vadd.f32 %v161, %v617
    %v623 = vxor.u32 %v622, 2147483648
    %v624 = vmul.f32 %v623, 1.442695
    %v625 = vpow.pop %v624
    %v626 = vadd.f32 %v625, 1.0
    %v627 = vrcp.pop %v626
    %v628 = vmul.f32 1.0, %v627
    %629 = vrot.lane.b32.xlu0 %v628, 96
    %v630 = vpop.permute.xlu0 %629
    %631 = vrot.lane.b32.xlu0 %v628, 64
    %v632 = vpop.permute.xlu0 %631
    %633 = vrot.lane.b32.xlu0 %v628, 32
    %v634 = vpop.permute.xlu0 %633
    %v635 = vmul.f32 %v630, %v578
    %v636 = vmul.f32 %v632, 2.0
    %v637 = vsub.f32 %v636, 1.0
    %v638 = vmul.f32 %v628, %v637
    %v639 = vadd.f32 %v635, %v638
    %v640 = vtanh.pop %v639
    %v641 = vmul.f32 %v634, %v640
    %v642 = vpack.c.bf16 %v641, %v641
    %643 = vmatprep.subr.bf16.mxu0 0
    %644 = vmatpush1.bf16.msra.mxu0 %v200
    %645 = vmatprep.subr.bf16.mxu0 0
    %646 = vmatpush1.bf16.msra.mxu0 %v201
    %647 = vmatprep.subr.bf16.mxu0 0
    %648 = vmatpush1.bf16.msra.mxu0 %v202
    %649 = vmatprep.subr.bf16.mxu0 0
    %650 = vmatpush1.bf16.msra.mxu0 %v203
    %651 = vmatprep.subr.bf16.mxu0 0
    %652 = vmatpush1.bf16.msra.mxu0 %v204
    %653 = vmatprep.subr.bf16.mxu0 0
    %654 = vmatpush1.bf16.msra.mxu0 %v205
    %655 = vmatprep.subr.bf16.mxu0 0
    %656 = vmatpush1.bf16.msra.mxu0 %v206
    %657 = vmatprep.subr.bf16.mxu0 0
    %658 = vmatpush1.bf16.msra.mxu0 %v207
    %659 = vmatprep.subr.bf16.mxu0 0
    %660 = vmatpush1.bf16.msra.mxu0 0
    %661 = vmatprep.subr.bf16.mxu0 0
    %662 = vmatpush1.bf16.msra.mxu0 0
    %663 = vmatprep.subr.bf16.mxu0 0
    %664 = vmatpush1.bf16.msra.mxu0 0
    %665 = vmatprep.subr.bf16.mxu0 0
    %666 = vmatpush1.bf16.msra.mxu0 0
    %667 = vmatprep.subr.bf16.mxu0 0
    %668 = vmatpush1.bf16.msra.mxu0 0
    %669 = vmatprep.subr.bf16.mxu0 0
    %670 = vmatpush1.bf16.msra.mxu0 0
    %671 = vmatprep.subr.bf16.mxu0 0
    %672 = vmatpush1.bf16.msra.mxu0 0
    %673 = vmatprep.subr.bf16.mxu0 0
    %674 = vmatpush1.bf16.msra.mxu0 0
    %675 = vmatprep.mubr.bf16.mxu0 0
    %676 = vmatmul.mubr.bf16.gmra.mrb[0].mxu0 %v642
    %v677 = vpop.f32.mrb[0].mxu0
    %v678 = vadd.f32 0.0, %v677
    %v679 = vpop.f32.mrb[0].mxu0
    %v680 = vpop.f32.mrb[0].mxu0
    %v681 = vpop.f32.mrb[0].mxu0
    %682 = vdwg.mxu0
    %v683 = vadd.f32 %v164, %v678
    %v684 = vxor.u32 %v683, 2147483648
    %v685 = vmul.f32 %v684, 1.442695
    %v686 = vpow.pop %v685
    %v687 = vadd.f32 %v686, 1.0
    %v688 = vrcp.pop %v687
    %v689 = vmul.f32 1.0, %v688
    %690 = vrot.lane.b32.xlu0 %v689, 96
    %v691 = vpop.permute.xlu0 %690
    %692 = vrot.lane.b32.xlu0 %v689, 64
    %v693 = vpop.permute.xlu0 %692
    %694 = vrot.lane.b32.xlu0 %v689, 32
    %v695 = vpop.permute.xlu0 %694
    %v696 = vmul.f32 %v691, %v639
    %v697 = vmul.f32 %v693, 2.0
    %v698 = vsub.f32 %v697, 1.0
    %v699 = vmul.f32 %v689, %v698
    %v700 = vadd.f32 %v696, %v699
    %v701 = vtanh.pop %v700
    %v702 = vmul.f32 %v695, %v701
    %v703 = vlaneseq
    %v704 = vshrl.u32 %v703, 7
    %vm705 = vcmp.lt.s32.totalorder %v704, 2
    %v706 = vsel %vm705, 0.5, 0.0
    %v707 = vmul.f32 %v702, %v706
    %v708 = vrot.slane %v707, 4
    %v709 = vadd.f32 %v707, %v708
    %v710 = vrot.slane %v709, 2
    %v711 = vadd.f32 %v709, %v710
    %v712 = vrot.slane %v711, 1
    %v713 = vadd.f32 %v711, %v712
    %vm714 = vcmask 253952
    %715 = vst.msk [vmem:[#allocation5] sm:$0x1] %vm714, %v713
    // Predicated region
    $region18: #{tpu_custom_call.1} parent=1 // pred_check
      _
    $region19: #{tpu_custom_call.1} parent=1 // pred_check_branch
      %717 = sbr.rel (0) target = $region21
    $region20: #{tpu_custom_call.1} parent=1 // pred_region
      %s719 = ssub.s32 16, 16
      %720 = vsyncadd [#allocation4], %s719
      %s722 = sshll.u32 [#allocation5], 4
      %s723 = int_to_ptr.vmem [resolvable:$true] %s722
      %725 = dma.vmem_to_hbm [thread:$0]  %s723, 16, %s3, [#allocation4]
    $region21: #{tpu_custom_call.1} parent=1 // pred_fallthru
      _
    // Predicated region
    $region22: #{tpu_custom_call.1} parent=1 // pred_check
      _
    $region23: #{tpu_custom_call.1} parent=1 // pred_check_branch
      %727 = sbr.rel (0) target = $region25
    $region24: #{tpu_custom_call.1} parent=1 // pred_region
      %728 = dma.done [#allocation4], 16
    $region25: #{tpu_custom_call.1} parent=1 // pred_fallthru
      _
    %729 = vsyncpa [#allocation3], 1
    %730 = vsyncpa [#allocation4], 1

</llo_original>
